<compile_context>
chip_gen: v7x
topology: tpu7x:2x2x1
jax: 0.10.0
libtpu: 0.0.40
codegen_flags: <defaults>
</compile_context>

<pallas_src>
import functools

import jax
import jax.numpy as jnp
from jax.experimental import pallas as pl
from jax.experimental.pallas import tpu as pltpu


def _mlp_kernel(xt_ref, w1_ref, b1_ref, w2_ref, b2_ref, w3_ref, b3_ref, o_ref):
    xt = xt_ref[...]                                  # (F, TB) bf16

    # fc1 + ReLU : (64, F) @ (F, TB) -> (64, TB); f32 accumulate, f32 VPU tail.
    h1 = jnp.dot(w1_ref[...], xt, preferred_element_type=jnp.float32)
    h1 = jnp.maximum(h1 + b1_ref[...], 0.0)

    # fc2 + ReLU : (32, 64) @ (64, TB) -> (32, TB)
    h2 = jnp.dot(w2_ref[...], h1.astype(jnp.bfloat16),
                 preferred_element_type=jnp.float32)
    h2 = jnp.maximum(h2 + b2_ref[...], 0.0)

    # fc3 + sigmoid : (1, 32) @ (32, TB) -> (1, TB); sigmoid on the EUP.
    z = jnp.dot(w3_ref[...], h2.astype(jnp.bfloat16),
                preferred_element_type=jnp.float32)
    o_ref[...] = jax.nn.sigmoid(z + b3_ref[...])


@functools.partial(jax.jit, static_argnames=("block_b",))
def simple_nn_forward(x, params, block_b=128):
    """x: (B, F) float32.  params: PyTorch layout -- W (out, in), b (out,)."""
    b, f = x.shape
    n_tiles = pl.cdiv(b, block_b)
    bp = n_tiles * block_b

    # Batch onto the 128-lane axis.  The transpose materializes a copy anyway,
    # so fuse the bf16 cast into it (halves streamed HBM bytes for x; the MXU
    # consumes bf16 regardless).  Pad batch up to a tile multiple.
    xt = x.T.astype(jnp.bfloat16)                               # (F, B) bf16
    if bp != b:
        xt = jnp.pad(xt, ((0, 0), (0, bp - b)))

    # Weights: bf16 for the MXU (cast once, outside the grid loop).
    w1 = params["w1"].astype(jnp.bfloat16)                      # (64, F)
    w2 = params["w2"].astype(jnp.bfloat16)                      # (32, 64)
    w3 = params["w3"].astype(jnp.bfloat16)                      # (1, 32)
    # Biases: f32 column vectors -> broadcast over the lane (batch) axis.
    b1 = params["b1"].reshape(-1, 1).astype(jnp.float32)        # (64, 1)
    b2 = params["b2"].reshape(-1, 1).astype(jnp.float32)        # (32, 1)
    b3 = params["b3"].reshape(-1, 1).astype(jnp.float32)        # (1, 1)

    resident = lambda i: (0, 0)   # same block every step -> stays in VMEM

    out_t = pl.pallas_call(
        _mlp_kernel,
        out_shape=jax.ShapeDtypeStruct((1, bp), jnp.float32),
        grid=(n_tiles,),
        in_specs=[
            pl.BlockSpec((f, block_b), lambda i: (0, i)),       # streamed x tile
            pl.BlockSpec(w1.shape, resident),
            pl.BlockSpec(b1.shape, resident),
            pl.BlockSpec(w2.shape, resident),
            pl.BlockSpec(b2.shape, resident),
            pl.BlockSpec(w3.shape, resident),
            pl.BlockSpec(b3.shape, resident),
        ],
        out_specs=pl.BlockSpec((1, block_b), lambda i: (0, i)),  # lane-dense out
        compiler_params=pltpu.CompilerParams(
            dimension_semantics=("parallel",)),                  # 2 TCs on v7x
    )(xt, w1, b1, w2, b2, w3, b3)

    return out_t[:, :b].T                                        # (B, 1)


def init_params(key, input_size):
    """PyTorch nn.Linear layout & init: W (out, in), b (out,), U(+-1/sqrt(fan_in))."""
    def linear(k, fan_in, fan_out):
        kw, kb = jax.random.split(k)
        bound = 1.0 / jnp.sqrt(jnp.float32(fan_in))
        w = jax.random.uniform(kw, (fan_out, fan_in), jnp.float32, -bound, bound)
        b = jax.random.uniform(kb, (fan_out,), jnp.float32, -bound, bound)
        return w, b

    k1, k2, k3 = jax.random.split(key, 3)
    w1, b1 = linear(k1, input_size, 64)
    w2, b2 = linear(k2, 64, 32)
    w3, b3 = linear(k3, 32, 1)
    return {"w1": w1, "b1": b1, "w2": w2, "b2": b2, "w3": w3, "b3": b3}


def simple_nn_reference(x, params):
    """Pure-JAX f32 reference matching the PyTorch forward."""
    h1 = jnp.maximum(x @ params["w1"].T + params["b1"], 0.0)
    h2 = jnp.maximum(h1 @ params["w2"].T + params["b2"], 0.0)
    z = h2 @ params["w3"].T + params["b3"]
    return jax.nn.sigmoid(z)


if __name__ == "__main__":
    key = jax.random.PRNGKey(0)
    kx, kp = jax.random.split(key)

    # Small, but exercises the batch grid (2 tiles of 128).
    batch, input_size = 256, 16
    x = jax.random.normal(kx, (batch, input_size), dtype=jnp.float32)
    params = init_params(kp, input_size)

    out = simple_nn_forward(x, params)
    jax.block_until_ready(out)

    ref = simple_nn_reference(x, params)
    assert out.shape == (batch, 1)
    max_err = float(jnp.max(jnp.abs(out - ref)))
    assert max_err < 3e-2, f"max abs err vs f32 reference: {max_err}"
    assert bool(jnp.all((out >= 0.0) & (out <= 1.0)))

    print("KERNEL_OK")
</pallas_src>

<mosaic_0001>
module attributes {stable_mosaic.version = 11 : i64} {
  func.func @_mlp_kernel(%arg0: i32, %arg1: memref<16x128xbf16, #tpu.memory_space<vmem>>, %arg2: memref<64x16xbf16, #tpu.memory_space<vmem>>, %arg3: memref<64x1xf32, #tpu.memory_space<vmem>>, %arg4: memref<32x64xbf16, #tpu.memory_space<vmem>>, %arg5: memref<32x1xf32, #tpu.memory_space<vmem>>, %arg6: memref<1x32xbf16, #tpu.memory_space<vmem>>, %arg7: memref<1x1xf32, #tpu.memory_space<vmem>>, %arg8: memref<1x128xf32, #tpu.memory_space<vmem>>) attributes {dimension_semantics = [#tpu.dimension_semantics<parallel>], iteration_bounds = array<i64: 2>, scalar_prefetch = 0 : i64, scratch_operands = 0 : i64, tpu.core_type = #tpu.core_type<tc>, window_params = [{transform_indices = @transform_0, window_bounds = array<i64: 16, 128>}, {pipeline_mode = #tpu.pipeline_mode<synchronous>, transform_indices = @transform_1, window_bounds = array<i64: 64, 16>}, {pipeline_mode = #tpu.pipeline_mode<synchronous>, transform_indices = @transform_2, window_bounds = array<i64: 64, 1>}, {pipeline_mode = #tpu.pipeline_mode<synchronous>, transform_indices = @transform_3, window_bounds = array<i64: 32, 64>}, {pipeline_mode = #tpu.pipeline_mode<synchronous>, transform_indices = @transform_4, window_bounds = array<i64: 32, 1>}, {pipeline_mode = #tpu.pipeline_mode<synchronous>, transform_indices = @transform_5, window_bounds = array<i64: 1, 32>}, {pipeline_mode = #tpu.pipeline_mode<synchronous>, transform_indices = @transform_6, window_bounds = array<i64: 1, 1>}, {transform_indices = @transform_7, window_bounds = array<i64: 1, 128>}]} {
    %c0 = arith.constant 0 : index
    %c0_0 = arith.constant 0 : index
    %0 = vector.load %arg1[%c0, %c0_0] : memref<16x128xbf16, #tpu.memory_space<vmem>>, vector<16x128xbf16>
    %c0_1 = arith.constant 0 : index
    %c0_2 = arith.constant 0 : index
    %1 = vector.load %arg2[%c0_1, %c0_2] : memref<64x16xbf16, #tpu.memory_space<vmem>>, vector<64x16xbf16>
    %cst = arith.constant dense<0.000000e+00> : vector<64x128xf32>
    %2 = tpu.matmul %1, %0, %cst {dimension_numbers = #tpu.dot_dimension_numbers<[1], [0], [0], [1], [0, 0, 1, 1], [], []>} : vector<64x16xbf16>, vector<16x128xbf16>, vector<64x128xf32> -> vector<64x128xf32>
    %c0_3 = arith.constant 0 : index
    %c0_4 = arith.constant 0 : index
    %3 = vector.load %arg3[%c0_3, %c0_4] : memref<64x1xf32, #tpu.memory_space<vmem>>, vector<64x1xf32>
    %4 = vector.broadcast %3 : vector<64x1xf32> to vector<64x128xf32>
    %5 = arith.addf %2, %4 : vector<64x128xf32>
    %cst_5 = arith.constant 0.000000e+00 : f32
    %6 = vector.broadcast %cst_5 : f32 to vector<64x128xf32>
    %7 = arith.maximumf %5, %6 : vector<64x128xf32>
    %c0_6 = arith.constant 0 : index
    %c0_7 = arith.constant 0 : index
    %8 = vector.load %arg4[%c0_6, %c0_7] : memref<32x64xbf16, #tpu.memory_space<vmem>>, vector<32x64xbf16>
    %9 = arith.truncf %7 : vector<64x128xf32> to vector<64x128xbf16>
    %cst_8 = arith.constant dense<0.000000e+00> : vector<32x128xf32>
    %10 = tpu.matmul %8, %9, %cst_8 {dimension_numbers = #tpu.dot_dimension_numbers<[1], [0], [0], [1], [0, 0, 1, 1], [], []>} : vector<32x64xbf16>, vector<64x128xbf16>, vector<32x128xf32> -> vector<32x128xf32>
    %c0_9 = arith.constant 0 : index
    %c0_10 = arith.constant 0 : index
    %11 = vector.load %arg5[%c0_9, %c0_10] : memref<32x1xf32, #tpu.memory_space<vmem>>, vector<32x1xf32>
    %12 = vector.broadcast %11 : vector<32x1xf32> to vector<32x128xf32>
    %13 = arith.addf %10, %12 : vector<32x128xf32>
    %cst_11 = arith.constant 0.000000e+00 : f32
    %14 = vector.broadcast %cst_11 : f32 to vector<32x128xf32>
    %15 = arith.maximumf %13, %14 : vector<32x128xf32>
    %c0_12 = arith.constant 0 : index
    %c0_13 = arith.constant 0 : index
    %16 = vector.load %arg6[%c0_12, %c0_13] : memref<1x32xbf16, #tpu.memory_space<vmem>>, vector<1x32xbf16>
    %17 = arith.truncf %15 : vector<32x128xf32> to vector<32x128xbf16>
    %cst_14 = arith.constant dense<0.000000e+00> : vector<1x128xf32>
    %18 = tpu.matmul %16, %17, %cst_14 {dimension_numbers = #tpu.dot_dimension_numbers<[1], [0], [0], [1], [0, 0, 1, 1], [], []>} : vector<1x32xbf16>, vector<32x128xbf16>, vector<1x128xf32> -> vector<1x128xf32>
    %c0_15 = arith.constant 0 : index
    %c0_16 = arith.constant 0 : index
    %19 = vector.load %arg7[%c0_15, %c0_16] : memref<1x1xf32, #tpu.memory_space<vmem>>, vector<1x1xf32>
    %20 = vector.broadcast %19 : vector<1x1xf32> to vector<1x128xf32>
    %21 = arith.addf %18, %20 : vector<1x128xf32>
    %22 = arith.negf %21 : vector<1x128xf32>
    %23 = math.exp %22 : vector<1x128xf32>
    %cst_17 = arith.constant 1.000000e+00 : f32
    %24 = vector.broadcast %cst_17 : f32 to vector<1x128xf32>
    %25 = arith.addf %24, %23 : vector<1x128xf32>
    %26 = arith.divf %24, %25 : vector<1x128xf32>
    %c0_18 = arith.constant 0 : index
    %c0_19 = arith.constant 0 : index
    %27 = vector.load %arg8[%c0_18, %c0_19] : memref<1x128xf32, #tpu.memory_space<vmem>>, vector<1x128xf32>
    tpu.vector_store %arg8[%c0_18, %c0_19], %26 {strides = array<i32>} : memref<1x128xf32, #tpu.memory_space<vmem>>, vector<1x128xf32>,
    return
  }
  func.func @transform_0(%arg0: i32) -> (i32, i32) {
    %c0_i32 = arith.constant 0 : i32
    %c0_i32_0 = arith.constant 0 : i32
    return %c0_i32, %arg0 : i32, i32
  }
  func.func @transform_1(%arg0: i32) -> (i32, i32) {
    %c0_i32 = arith.constant 0 : i32
    %c0_i32_0 = arith.constant 0 : i32
    %c0_i32_1 = arith.constant 0 : i32
    return %c0_i32, %c0_i32_0 : i32, i32
  }
  func.func @transform_2(%arg0: i32) -> (i32, i32) {
    %c0_i32 = arith.constant 0 : i32
    %c0_i32_0 = arith.constant 0 : i32
    %c0_i32_1 = arith.constant 0 : i32
    return %c0_i32, %c0_i32_0 : i32, i32
  }
  func.func @transform_3(%arg0: i32) -> (i32, i32) {
    %c0_i32 = arith.constant 0 : i32
    %c0_i32_0 = arith.constant 0 : i32
    %c0_i32_1 = arith.constant 0 : i32
    return %c0_i32, %c0_i32_0 : i32, i32
  }
  func.func @transform_4(%arg0: i32) -> (i32, i32) {
    %c0_i32 = arith.constant 0 : i32
    %c0_i32_0 = arith.constant 0 : i32
    %c0_i32_1 = arith.constant 0 : i32
    return %c0_i32, %c0_i32_0 : i32, i32
  }
  func.func @transform_5(%arg0: i32) -> (i32, i32) {
    %c0_i32 = arith.constant 0 : i32
    %c0_i32_0 = arith.constant 0 : i32
    %c0_i32_1 = arith.constant 0 : i32
    return %c0_i32, %c0_i32_0 : i32, i32
  }
  func.func @transform_6(%arg0: i32) -> (i32, i32) {
    %c0_i32 = arith.constant 0 : i32
    %c0_i32_0 = arith.constant 0 : i32
    %c0_i32_1 = arith.constant 0 : i32
    return %c0_i32, %c0_i32_0 : i32, i32
  }
  func.func @transform_7(%arg0: i32) -> (i32, i32) {
    %c0_i32 = arith.constant 0 : i32
    %c0_i32_0 = arith.constant 0 : i32
    return %c0_i32, %arg0 : i32, i32
  }
}

</mosaic_0001>

<llo_original>
// kernel: simple_nn_forward.1
$region0: #{simple_nn_forward.1}
  #allocation0 [shape = 'u32[]', space=smem, size = 0x4, offset = 0x4, fixed_abs, tag = 'smem constant byte address 0x4 - core index']
  #allocation1 [shape = 'u32[144,128]{1,0:T(1,128)}', space=vmem, size = 0x12000, scoped, tag = 'internal scratch']
  #allocation2 [shape = 'f32[1,1]{1,0:T(1,128)S(1)}', space=vmem, size = 0x200, scoped, tag = 'scoped memory for simple_nn_forward.1']
  %s0 = inlined_call_operand.vmem [shape: bf16[16,256], index: 0, kind: input, shape index: {}]
  %s1 = inlined_call_operand.vmem [shape: bf16[64,16], index: 1, kind: input, shape index: {}]
  %s2 = inlined_call_operand.vmem [shape: f32[64,1], index: 2, kind: input, shape index: {}]
  %s3 = inlined_call_operand.vmem [shape: bf16[32,64], index: 3, kind: input, shape index: {}]
  %s4 = inlined_call_operand.vmem [shape: f32[32,1], index: 4, kind: input, shape index: {}]
  %s5 = inlined_call_operand.vmem [shape: bf16[1,32], index: 5, kind: input, shape index: {}]
  %s6 = inlined_call_operand.<no memory space> [shape: f32[1,1], index: 6, kind: input, shape index: {}]
  %s7 = inlined_call_operand.hbm [shape: f32[1,256], index: 7, kind: output, shape index: {}]
  %s8 = sld [smem:[#allocation0]]
  $region102: #{simple_nn_forward.1} parent=0
    _
  %s10 = ssub.s32 1, %s8
  %s11 = scalar_select 0, %s10, %s8
  %v12 = vstv %s6
  %13 = vst [vmem:[#allocation2] sm:$0x1] %v12
  $region1: #{simple_nn_forward.1} parent=0
    #allocation3 [shape = 'u8[8192]{0}', space=vmem, size = 0x2000, scoped, tag = 'input window, operand 0']
    #allocation4 [shape = 'u8[1024]{0}', space=vmem, size = 0x400, scoped, tag = 'output window, operand 0']
    #allocation5 [shape = 's32[2]{0}', space=sflag, size = 0x8, scoped, tag = 'scoped memory for simple_nn_forward.1']
    %14 = vsyncpa [#allocation5], 0
    %s15 = scalar_lea.sflag [#allocation5], 1
    %16 = vsyncpa %s15, 0
    loop: start=0, step=1, limit=4
    $region2: #{simple_nn_forward.1} parent=1 // loop_pre_header
      _
    $region3: #{simple_nn_forward.1} parent=1 // loop_header
      %s18 = sphi 0, %s22
      %p19 = scmp.ge.s32.totalorder %s18, 4
      %s28 = sphi 0, %s30
      %s31 = sphi 0, %s28
      %s32 = sphi 0, %s31
      %s48 = sphi 0, %s32
      %s52 = sphi 0, %s52
      %s54 = sphi 0, %s52
      %s55 = sphi 0, %s54
      %s69 = sphi 0, %s55
      %s73 = sphi 0, %s73
      %s75 = sphi 0, %s73
      %s76 = sphi 0, %s75
      %s90 = sphi 0, %s76
      %s94 = sphi 0, %s94
      %s96 = sphi 0, %s94
      %s97 = sphi 0, %s96
      %s111 = sphi 0, %s97
      %s115 = sphi 0, %s115
      %s117 = sphi 0, %s115
      %s118 = sphi 0, %s117
      %s132 = sphi 0, %s118
      %s136 = sphi 0, %s136
      %s138 = sphi 0, %s136
      %s139 = sphi 0, %s138
      %s153 = sphi 0, %s139
      %s157 = sphi 0, %s157
      %s159 = sphi 0, %s157
      %s160 = sphi 0, %s159
      %s174 = sphi 0, %s160
      %s180 = sphi 0, %s182
      %s183 = sphi 0, %s180
      %s184 = sphi 0, %s183
      %s200 = sphi 0, %s184
    $region4: #{simple_nn_forward.1} parent=1 // loop_header_branch
      %21 = sbr.rel (%p19) target = $region8
    $region5: #{simple_nn_forward.1} parent=1 // loop_body
      %s23 = ssub.s32 %s18, 1
      %s24 = ssub.s32 %s18, 2
      %s25 = sadd.s32 %s18, 1
      %s26 = ssub.s32 %s18, %s25
      %p27 = scmp.eq.s32.totalorder %s26, 0
      %s29 = sadd.s32 %s28, 1
      %s30 = scalar_select %p27, %s28, %s29
      %p33 = pneg %p27
      %p34 = scmp.eq.s32.totalorder %s18, 1
      %p35 = por %p33, %p34
      %p36 = scmp.ne.s32.totalorder %s28, %s31
      %p37 = scmp.eq.s32.totalorder %s18, 0
      %p38 = por %p36, %p37
      %p39 = scmp.ne.s32.totalorder %s28, %s31
      %p40 = scmp.eq.s32.totalorder %s23, 1
      %p41 = por %p39, %p40
      %p42 = scmp.ne.s32.totalorder %s31, %s32
      %p43 = scmp.eq.s32.totalorder %s23, 0
      %p44 = por %p42, %p43
      %p45 = scmp.ne.s32.totalorder %s31, %s32
      %p46 = scmp.eq.s32.totalorder %s24, 1
      %p47 = por %p45, %p46
      %p49 = scmp.ne.s32.totalorder %s32, %s48
      %p50 = scmp.eq.s32.totalorder %s24, 0
      %p51 = por %p49, %p50
      %s53 = sadd.s32 %s52, 1
      %p56 = scmp.eq.s32.totalorder %s18, 1
      %p57 = scmp.ne.s32.totalorder %s52, %s54
      %p58 = scmp.eq.s32.totalorder %s18, 0
      %p59 = por %p57, %p58
      %p60 = scmp.ne.s32.totalorder %s52, %s54
      %p61 = scmp.eq.s32.totalorder %s23, 1
      %p62 = por %p60, %p61
      %p63 = scmp.ne.s32.totalorder %s54, %s55
      %p64 = scmp.eq.s32.totalorder %s23, 0
      %p65 = por %p63, %p64
      %p66 = scmp.ne.s32.totalorder %s54, %s55
      %p67 = scmp.eq.s32.totalorder %s24, 1
      %p68 = por %p66, %p67
      %p70 = scmp.ne.s32.totalorder %s55, %s69
      %p71 = scmp.eq.s32.totalorder %s24, 0
      %p72 = por %p70, %p71
      %s74 = sadd.s32 %s73, 1
      %p77 = scmp.eq.s32.totalorder %s18, 1
      %p78 = scmp.ne.s32.totalorder %s73, %s75
      %p79 = scmp.eq.s32.totalorder %s18, 0
      %p80 = por %p78, %p79
      %p81 = scmp.ne.s32.totalorder %s73, %s75
      %p82 = scmp.eq.s32.totalorder %s23, 1
      %p83 = por %p81, %p82
      %p84 = scmp.ne.s32.totalorder %s75, %s76
      %p85 = scmp.eq.s32.totalorder %s23, 0
      %p86 = por %p84, %p85
      %p87 = scmp.ne.s32.totalorder %s75, %s76
      %p88 = scmp.eq.s32.totalorder %s24, 1
      %p89 = por %p87, %p88
      %p91 = scmp.ne.s32.totalorder %s76, %s90
      %p92 = scmp.eq.s32.totalorder %s24, 0
      %p93 = por %p91, %p92
      %s95 = sadd.s32 %s94, 1
      %p98 = scmp.eq.s32.totalorder %s18, 1
      %p99 = scmp.ne.s32.totalorder %s94, %s96
      %p100 = scmp.eq.s32.totalorder %s18, 0
      %p101 = por %p99, %p100
      %p102 = scmp.ne.s32.totalorder %s94, %s96
      %p103 = scmp.eq.s32.totalorder %s23, 1
      %p104 = por %p102, %p103
      %p105 = scmp.ne.s32.totalorder %s96, %s97
      %p106 = scmp.eq.s32.totalorder %s23, 0
      %p107 = por %p105, %p106
      %p108 = scmp.ne.s32.totalorder %s96, %s97
      %p109 = scmp.eq.s32.totalorder %s24, 1
      %p110 = por %p108, %p109
      %p112 = scmp.ne.s32.totalorder %s97, %s111
      %p113 = scmp.eq.s32.totalorder %s24, 0
      %p114 = por %p112, %p113
      %s116 = sadd.s32 %s115, 1
      %p119 = scmp.eq.s32.totalorder %s18, 1
      %p120 = scmp.ne.s32.totalorder %s115, %s117
      %p121 = scmp.eq.s32.totalorder %s18, 0
      %p122 = por %p120, %p121
      %p123 = scmp.ne.s32.totalorder %s115, %s117
      %p124 = scmp.eq.s32.totalorder %s23, 1
      %p125 = por %p123, %p124
      %p126 = scmp.ne.s32.totalorder %s117, %s118
      %p127 = scmp.eq.s32.totalorder %s23, 0
      %p128 = por %p126, %p127
      %p129 = scmp.ne.s32.totalorder %s117, %s118
      %p130 = scmp.eq.s32.totalorder %s24, 1
      %p131 = por %p129, %p130
      %p133 = scmp.ne.s32.totalorder %s118, %s132
      %p134 = scmp.eq.s32.totalorder %s24, 0
      %p135 = por %p133, %p134
      %s137 = sadd.s32 %s136, 1
      %p140 = scmp.eq.s32.totalorder %s18, 1
      %p141 = scmp.ne.s32.totalorder %s136, %s138
      %p142 = scmp.eq.s32.totalorder %s18, 0
      %p143 = por %p141, %p142
      %p144 = scmp.ne.s32.totalorder %s136, %s138
      %p145 = scmp.eq.s32.totalorder %s23, 1
      %p146 = por %p144, %p145
      %p147 = scmp.ne.s32.totalorder %s138, %s139
      %p148 = scmp.eq.s32.totalorder %s23, 0
      %p149 = por %p147, %p148
      %p150 = scmp.ne.s32.totalorder %s138, %s139
      %p151 = scmp.eq.s32.totalorder %s24, 1
      %p152 = por %p150, %p151
      %p154 = scmp.ne.s32.totalorder %s139, %s153
      %p155 = scmp.eq.s32.totalorder %s24, 0
      %p156 = por %p154, %p155
      %s158 = sadd.s32 %s157, 1
      %p161 = scmp.eq.s32.totalorder %s18, 1
      %p162 = scmp.ne.s32.totalorder %s157, %s159
      %p163 = scmp.eq.s32.totalorder %s18, 0
      %p164 = por %p162, %p163
      %p165 = scmp.ne.s32.totalorder %s157, %s159
      %p166 = scmp.eq.s32.totalorder %s23, 1
      %p167 = por %p165, %p166
      %p168 = scmp.ne.s32.totalorder %s159, %s160
      %p169 = scmp.eq.s32.totalorder %s23, 0
      %p170 = por %p168, %p169
      %p171 = scmp.ne.s32.totalorder %s159, %s160
      %p172 = scmp.eq.s32.totalorder %s24, 1
      %p173 = por %p171, %p172
      %p175 = scmp.ne.s32.totalorder %s160, %s174
      %p176 = scmp.eq.s32.totalorder %s24, 0
      %p177 = por %p175, %p176
      %s178 = ssub.s32 %s18, %s25
      %p179 = scmp.eq.s32.totalorder %s178, 0
      %s181 = sadd.s32 %s180, 1
      %s182 = scalar_select %p179, %s180, %s181
      %p185 = pneg %p179
      %p186 = scmp.eq.s32.totalorder %s18, 1
      %p187 = por %p185, %p186
      %p188 = scmp.ne.s32.totalorder %s180, %s183
      %p189 = scmp.eq.s32.totalorder %s18, 0
      %p190 = por %p188, %p189
      %p191 = scmp.ne.s32.totalorder %s180, %s183
      %p192 = scmp.eq.s32.totalorder %s23, 1
      %p193 = por %p191, %p192
      %p194 = scmp.ne.s32.totalorder %s183, %s184
      %p195 = scmp.eq.s32.totalorder %s23, 0
      %p196 = por %p194, %p195
      %p197 = scmp.ne.s32.totalorder %s183, %s184
      %p198 = scmp.eq.s32.totalorder %s24, 1
      %p199 = por %p197, %p198
      %p201 = scmp.ne.s32.totalorder %s184, %s200
      %p202 = scmp.eq.s32.totalorder %s24, 0
      %p203 = por %p201, %p202
      %p204 = scmp.le.s32.totalorder 1, %s18
      %p205 = scmp.lt.s32.totalorder %s18, 3
      %p206 = pnand %p204, %p205
      %p207 = pneg %p206
      // Predicated region
      $region9: #{simple_nn_forward.1} parent=5 // pred_check
        _
      $region10: #{simple_nn_forward.1} parent=5 // pred_check_branch
        %209 = sbr.rel (%p206) target = $region12
      $region11: #{simple_nn_forward.1} parent=5 // pred_region
        %s210 = ssub.s32 %s18, 1
        // Predicated region
        $region13: #{simple_nn_forward.1} parent=11 // pred_check
          %p211 = pneg %p65
        $region14: #{simple_nn_forward.1} parent=11 // pred_check_branch
          %213 = sbr.rel (%p211) target = $region16
        $region15: #{simple_nn_forward.1} parent=11 // pred_region
          _
        $region16: #{simple_nn_forward.1} parent=11 // pred_fallthru
          _
        // Predicated region
        $region17: #{simple_nn_forward.1} parent=11 // pred_check
          %p214 = pneg %p86
        $region18: #{simple_nn_forward.1} parent=11 // pred_check_branch
          %216 = sbr.rel (%p214) target = $region20
        $region19: #{simple_nn_forward.1} parent=11 // pred_region
          _
        $region20: #{simple_nn_forward.1} parent=11 // pred_fallthru
          _
        // Predicated region
        $region21: #{simple_nn_forward.1} parent=11 // pred_check
          %p217 = pneg %p107
        $region22: #{simple_nn_forward.1} parent=11 // pred_check_branch
          %219 = sbr.rel (%p217) target = $region24
        $region23: #{simple_nn_forward.1} parent=11 // pred_region
          _
        $region24: #{simple_nn_forward.1} parent=11 // pred_fallthru
          _
        // Predicated region
        $region25: #{simple_nn_forward.1} parent=11 // pred_check
          %p220 = pneg %p128
        $region26: #{simple_nn_forward.1} parent=11 // pred_check_branch
          %222 = sbr.rel (%p220) target = $region28
        $region27: #{simple_nn_forward.1} parent=11 // pred_region
          _
        $region28: #{simple_nn_forward.1} parent=11 // pred_fallthru
          _
        // Predicated region
        $region29: #{simple_nn_forward.1} parent=11 // pred_check
          %p223 = pneg %p149
        $region30: #{simple_nn_forward.1} parent=11 // pred_check_branch
          %225 = sbr.rel (%p223) target = $region32
        $region31: #{simple_nn_forward.1} parent=11 // pred_region
          _
        $region32: #{simple_nn_forward.1} parent=11 // pred_fallthru
          _
        // Predicated region
        $region33: #{simple_nn_forward.1} parent=11 // pred_check
          %p226 = pneg %p170
        $region34: #{simple_nn_forward.1} parent=11 // pred_check_branch
          %228 = sbr.rel (%p226) target = $region36
        $region35: #{simple_nn_forward.1} parent=11 // pred_region
          _
        $region36: #{simple_nn_forward.1} parent=11 // pred_fallthru
          _
      $region12: #{simple_nn_forward.1} parent=5 // pred_fallthru
        _
      %p229 = scmp.lt.s32.totalorder %s18, 2
      // Predicated region
      $region37: #{simple_nn_forward.1} parent=5 // pred_check
        %p230 = pneg %p229
      $region38: #{simple_nn_forward.1} parent=5 // pred_check_branch
        %232 = sbr.rel (%p230) target = $region40
      $region39: #{simple_nn_forward.1} parent=5 // pred_region
        // Predicated region
        $region41: #{simple_nn_forward.1} parent=39 // pred_check
          %p233 = pneg %p38
        $region42: #{simple_nn_forward.1} parent=39 // pred_check_branch
          %235 = sbr.rel (%p233) target = $region44
        $region43: #{simple_nn_forward.1} parent=39 // pred_region
          %s236 = sand.u32 %s28, 1
          %s237 = sand.u32 %s28, 1
          %s238 = smul.addr %s237, 8
          %s239 = scalar_lea.vmem [#allocation3], %s238
          %s240 = smul.addr %s18, 4
          %s241 = scalar_lea.vmem %s0, %s240
          // Predicated region
          $region45: #{simple_nn_forward.1} parent=43 // pred_check
            _
          $region46: #{simple_nn_forward.1} parent=43 // pred_check_branch
            %243 = sbr.rel (0) target = $region48
          $region47: #{simple_nn_forward.1} parent=43 // pred_region
            // Predicated region
            $region49: #{simple_nn_forward.1} parent=47 // pred_check
              _
            $region50: #{simple_nn_forward.1} parent=47 // pred_check_branch
              %245 = sbr.rel target = $region52
            $region51: #{simple_nn_forward.1} parent=47 // pred_region
              // Predicated region
              $region64: #{simple_nn_forward.1} parent=51 // pred_check
                _
              $region65: #{simple_nn_forward.1} parent=51 // pred_check_branch
                %262 = sbr.rel (0) target = $region67
              $region66: #{simple_nn_forward.1} parent=51 // pred_region
                loop: start=0, step=1, limit=1
                $region68: #{simple_nn_forward.1} parent=66 // loop_pre_header
                  _
                $region69: #{simple_nn_forward.1} parent=66 // loop_header
                  %s264 = sphi 0, %s268
                  %p265 = scmp.ge.s32.totalorder %s264, 1
                  %s269 = sphi %s241, %s241
                  %s270 = sphi %s239, %s239
                $region70: #{simple_nn_forward.1} parent=66 // loop_header_branch
                  %267 = sbr.rel (%p265) target = $region74
                $region71: #{simple_nn_forward.1} parent=66 // loop_body
                  _
                $region72: #{simple_nn_forward.1} parent=66 // loop_footer
                  %s268 = sadd.s32 1, %s264
                $region73: #{simple_nn_forward.1} parent=66 // loop_footer_branch
                  %263 = sbr.rel target = $region69
                $region74: #{simple_nn_forward.1} parent=66 // loop_exit
                  _
                loop: start=0, step=1, limit=1
                $region75: #{simple_nn_forward.1} parent=66 // loop_pre_header
                  _
                $region76: #{simple_nn_forward.1} parent=66 // loop_header
                  %s273 = sphi 0, %s277
                  %p274 = scmp.ge.s32.totalorder %s273, 1
                  %s278 = sphi %s241, %s241
                  %s279 = sphi %s239, %s239
                $region77: #{simple_nn_forward.1} parent=66 // loop_header_branch
                  %276 = sbr.rel (%p274) target = $region81
                $region78: #{simple_nn_forward.1} parent=66 // loop_body
                  %v280 = vld [vmem:[%s278] sm:$0xf]
                  %281 = vst [vmem:[%s279] sm:$0xf] %v280
                  %v282 = vld [vmem:[%s278 + $0x8] sm:$0xf]
                  %283 = vst [vmem:[%s279 + $0x4] sm:$0xf] %v282
                $region79: #{simple_nn_forward.1} parent=66 // loop_footer
                  %s277 = sadd.s32 1, %s273
                $region80: #{simple_nn_forward.1} parent=66 // loop_footer_branch
                  %272 = sbr.rel target = $region76
                $region81: #{simple_nn_forward.1} parent=66 // loop_exit
                  _
              $region67: #{simple_nn_forward.1} parent=51 // pred_fallthru
                _
            $region52: #{simple_nn_forward.1} parent=47 // pred_fallthru
              _
            // Predicated region
            $region53: #{simple_nn_forward.1} parent=47 // pred_check
              _
            $region54: #{simple_nn_forward.1} parent=47 // pred_check_branch
              %247 = sbr.rel (0) target = $region56
            $region55: #{simple_nn_forward.1} parent=47 // pred_region
              loop: start=0, step=1, limit=1
              $region57: #{simple_nn_forward.1} parent=55 // loop_pre_header
                _
              $region58: #{simple_nn_forward.1} parent=55 // loop_header
                %s250 = sphi 0, %s254
                %p251 = scmp.ge.s32.totalorder %s250, 1
                %s255 = sphi %s241, %s241
                %s256 = sphi %s239, %s239
              $region59: #{simple_nn_forward.1} parent=55 // loop_header_branch
                %253 = sbr.rel (%p251) target = $region63
              $region60: #{simple_nn_forward.1} parent=55 // loop_body
                %v257 = vld [vmem:[%s255] sm:$0xf]
                %258 = vst [vmem:[%s256] sm:$0xf] %v257
                %v259 = vld [vmem:[%s255 + $0x8] sm:$0xf]
                %260 = vst [vmem:[%s256 + $0x4] sm:$0xf] %v259
              $region61: #{simple_nn_forward.1} parent=55 // loop_footer
                %s254 = sadd.s32 1, %s250
              $region62: #{simple_nn_forward.1} parent=55 // loop_footer_branch
                %249 = sbr.rel target = $region58
              $region63: #{simple_nn_forward.1} parent=55 // loop_exit
                _
            $region56: #{simple_nn_forward.1} parent=47 // pred_fallthru
              _
          $region48: #{simple_nn_forward.1} parent=43 // pred_fallthru
            _
          %284 = vnop
        $region44: #{simple_nn_forward.1} parent=39 // pred_fallthru
          _
      $region40: #{simple_nn_forward.1} parent=5 // pred_fallthru
        _
      %p285 = scmp.le.s32.totalorder 1, %s18
      %p286 = scmp.lt.s32.totalorder %s18, 3
      %p287 = pnand %p285, %p286
      %p288 = pneg %p287
      // Predicated region
      $region82: #{simple_nn_forward.1} parent=5 // pred_check
        _
      $region83: #{simple_nn_forward.1} parent=5 // pred_check_branch
        %290 = sbr.rel (%p287) target = $region85
      $region84: #{simple_nn_forward.1} parent=5 // pred_region
        %s291 = ssub.s32 %s18, 1
        %s292 = sand.u32 %s31, 1
        %s293 = sand.u32 %s31, 1
        %s294 = smul.addr %s293, 8
        %s295 = scalar_lea.vmem [#allocation3], %s294
        // Predicated region
        $region86: #{simple_nn_forward.1} parent=84 // pred_check
          %p296 = pneg %p44
        $region87: #{simple_nn_forward.1} parent=84 // pred_check_branch
          %298 = sbr.rel (%p296) target = $region89
        $region88: #{simple_nn_forward.1} parent=84 // pred_region
          _
        $region89: #{simple_nn_forward.1} parent=84 // pred_fallthru
          _
        %s299 = sand.u32 %s31, 1
        %s300 = sand.u32 %s31, 1
        %s301 = smul.addr %s300, 8
        %s302 = scalar_lea.vmem [#allocation3], %s301
        %p303 = pneg %p44
        %p304 = pneg %p41
        %p305 = pneg %p65
        %p306 = pneg %p62
        %p307 = pneg %p86
        %p308 = pneg %p83
        %p309 = pneg %p107
        %p310 = pneg %p104
        %p311 = pneg %p128
        %p312 = pneg %p125
        %p313 = pneg %p149
        %p314 = pneg %p146
        %p315 = pneg %p170
        %p316 = pneg %p167
        %p317 = pneg %p196
        %p318 = pneg %p193
        %s319 = sand.u32 %s183, 1
        %s320 = scalar_lea.sflag [#allocation5], %s319
        %s321 = sand.u32 %s183, 1
        %s322 = scalar_lea.vmem [#allocation4], %s321
        %v324 = vld [vmem:[%s295] sm:$0xf]
        %v325 = vld [vmem:[%s295 + $0x4] sm:$0xf]
        %v326 = vld [vmem:[%s1] sm:$0xf]
        %v327 = vld [vmem:[%s1 + $0x4] sm:$0xf]
        %v328 = vld [vmem:[%s1 + $0x8] sm:$0xf]
        %v329 = vld [vmem:[%s1 + $0xc] sm:$0xf]
        %v330 = vld [vmem:[%s1 + $0x10] sm:$0xf]
        %v331 = vld [vmem:[%s1 + $0x14] sm:$0xf]
        %v332 = vld [vmem:[%s1 + $0x18] sm:$0xf]
        %v333 = vld [vmem:[%s1 + $0x1c] sm:$0xf]
        %v334 = vld [vmem:[%s2] sm:$0xff]
        %v335 = vld [vmem:[%s2 + $0x8] sm:$0xff]
        %v336 = vld [vmem:[%s2 + $0x10] sm:$0xff]
        %v337 = vld [vmem:[%s2 + $0x18] sm:$0xff]
        %v338 = vld [vmem:[%s2 + $0x20] sm:$0xff]
        %v339 = vld [vmem:[%s2 + $0x28] sm:$0xff]
        %v340 = vld [vmem:[%s2 + $0x30] sm:$0xff]
        %v341 = vld [vmem:[%s2 + $0x38] sm:$0xff]
        %343 = vset.pattern.permute.xlu0 0
        %344 = vperm.xlu0 %343, %v334
        %v345 = vpop.permute.xlu0 %344
        %348 = vset.pattern.permute.xlu0 0
        %349 = vperm.xlu0 %348, %v335
        %v350 = vpop.permute.xlu0 %349
        %353 = vset.pattern.permute.xlu0 0
        %354 = vperm.xlu0 %353, %v336
        %v355 = vpop.permute.xlu0 %354
        %358 = vset.pattern.permute.xlu0 0
        %359 = vperm.xlu0 %358, %v337
        %v360 = vpop.permute.xlu0 %359
        %363 = vset.pattern.permute.xlu0 0
        %364 = vperm.xlu0 %363, %v338
        %v365 = vpop.permute.xlu0 %364
        %368 = vset.pattern.permute.xlu0 0
        %369 = vperm.xlu0 %368, %v339
        %v370 = vpop.permute.xlu0 %369
        %373 = vset.pattern.permute.xlu0 0
        %374 = vperm.xlu0 %373, %v340
        %v375 = vpop.permute.xlu0 %374
        %378 = vset.pattern.permute.xlu0 0
        %379 = vperm.xlu0 %378, %v341
        %v380 = vpop.permute.xlu0 %379
        %v390 = vunpack.c.l.b16 %v326
        %v391 = vunpack.c.l.b16 %v327
        %v392 = vunpack.c.l.b16 %v328
        %v393 = vunpack.c.l.b16 %v329
        %v394 = vunpack.c.l.b16 %v330
        %v395 = vunpack.c.l.b16 %v331
        %v396 = vunpack.c.l.b16 %v332
        %v397 = vunpack.c.l.b16 %v333
        %v398 = vpack.c.b16 %v391, %v390
        %v399 = vpack.c.b16 %v393, %v392
        %v400 = vpack.c.b16 %v395, %v394
        %v401 = vpack.c.b16 %v397, %v396
        %v404 = vunpack.c.l.b16 %v324
        %v405 = vunpack.c.l.b16 %v325
        %v406 = vpack.c.b16 %v405, %v404
        %vm408 = vcmask 130048
        %v410 = vsel %vm408, %v398, 0
        %v413 = vsel %vm408, %v399, 0
        %v416 = vsel %vm408, %v400, 0
        %v419 = vsel %vm408, %v401, 0
        %421 = vmatprep.subr.bf16.mxu0 0
        %422 = vmatpush1.bf16.msra.mxu0 %v406
        %423 = vmatprep.subr.bf16.mxu0 0
        %424 = vmatpush1.bf16.msra.mxu0 0
        %425 = vmatprep.subr.bf16.mxu0 0
        %426 = vmatpush1.bf16.msra.mxu0 0
        %427 = vmatprep.subr.bf16.mxu0 0
        %428 = vmatpush1.bf16.msra.mxu0 0
        %429 = vmatprep.subr.bf16.mxu0 0
        %430 = vmatpush1.bf16.msra.mxu0 0
        %431 = vmatprep.subr.bf16.mxu0 0
        %432 = vmatpush1.bf16.msra.mxu0 0
        %433 = vmatprep.subr.bf16.mxu0 0
        %434 = vmatpush1.bf16.msra.mxu0 0
        %435 = vmatprep.subr.bf16.mxu0 0
        %436 = vmatpush1.bf16.msra.mxu0 0
        %437 = vmatprep.subr.bf16.mxu0 0
        %438 = vmatpush1.bf16.msra.mxu0 0
        %439 = vmatprep.subr.bf16.mxu0 0
        %440 = vmatpush1.bf16.msra.mxu0 0
        %441 = vmatprep.subr.bf16.mxu0 0
        %442 = vmatpush1.bf16.msra.mxu0 0
        %443 = vmatprep.subr.bf16.mxu0 0
        %444 = vmatpush1.bf16.msra.mxu0 0
        %445 = vmatprep.subr.bf16.mxu0 0
        %446 = vmatpush1.bf16.msra.mxu0 0
        %447 = vmatprep.subr.bf16.mxu0 0
        %448 = vmatpush1.bf16.msra.mxu0 0
        %449 = vmatprep.subr.bf16.mxu0 0
        %450 = vmatpush1.bf16.msra.mxu0 0
        %451 = vmatprep.subr.bf16.mxu0 0
        %452 = vmatpush1.bf16.msra.mxu0 0
        %453 = vmatprep.mubr.bf16.mxu0 0
        %454 = vmatmul.mubr.bf16.gmra.mrb[0].mxu0 %v410
        %v455 = vpop.f32.mrb[0].mxu0
        %v456 = vadd.f32 %v345, %v455
        %v457 = vpop.f32.mrb[0].mxu0
        %v458 = vpop.f32.mrb[0].mxu0
        %v459 = vadd.f32 %v350, %v458
        %v460 = vpop.f32.mrb[0].mxu0
        %461 = vmatprep.mubr.bf16.mxu0 0
        %462 = vmatmul.mubr.bf16.gmra.mrb[0].mxu0 %v413
        %v463 = vpop.f32.mrb[0].mxu0
        %v464 = vadd.f32 %v355, %v463
        %v465 = vpop.f32.mrb[0].mxu0
        %v466 = vpop.f32.mrb[0].mxu0
        %v467 = vadd.f32 %v360, %v466
        %v468 = vpop.f32.mrb[0].mxu0
        %469 = vmatprep.mubr.bf16.mxu0 0
        %470 = vmatmul.mubr.bf16.gmra.mrb[0].mxu0 %v416
        %v471 = vpop.f32.mrb[0].mxu0
        %v472 = vadd.f32 %v365, %v471
        %v473 = vpop.f32.mrb[0].mxu0
        %v474 = vpop.f32.mrb[0].mxu0
        %v475 = vadd.f32 %v370, %v474
        %v476 = vpop.f32.mrb[0].mxu0
        %477 = vmatprep.mubr.bf16.mxu0 0
        %478 = vmatmul.mubr.bf16.gmra.mrb[0].mxu0 %v419
        %v479 = vpop.f32.mrb[0].mxu0
        %v480 = vadd.f32 %v375, %v479
        %v481 = vpop.f32.mrb[0].mxu0
        %v482 = vpop.f32.mrb[0].mxu0
        %v483 = vadd.f32 %v380, %v482
        %v484 = vpop.f32.mrb[0].mxu0
        %485 = vdwg.mxu0
        %v486 = vmax.f32 %v456, 0.0
        %v487 = vmax.f32 %v459, 0.0
        %v488 = vmax.f32 %v464, 0.0
        %v489 = vmax.f32 %v467, 0.0
        %v490 = vmax.f32 %v472, 0.0
        %v491 = vmax.f32 %v475, 0.0
        %v492 = vmax.f32 %v480, 0.0
        %v493 = vmax.f32 %v483, 0.0
        %v494 = vld [vmem:[%s3] sm:$0xf]
        %v495 = vld [vmem:[%s3 + $0x4] sm:$0xf]
        %v496 = vld [vmem:[%s3 + $0x8] sm:$0xf]
        %v497 = vld [vmem:[%s3 + $0xc] sm:$0xf]
        %v498 = vpack.c.bf16 %v487, %v486
        %v499 = vpack.c.bf16 %v489, %v488
        %v500 = vpack.c.bf16 %v491, %v490
        %v501 = vpack.c.bf16 %v493, %v492
        %v502 = vld [vmem:[%s4] sm:$0xff]
        %v503 = vld [vmem:[%s4 + $0x8] sm:$0xff]
        %v504 = vld [vmem:[%s4 + $0x10] sm:$0xff]
        %v505 = vld [vmem:[%s4 + $0x18] sm:$0xff]
        %507 = vset.pattern.permute.xlu0 0
        %508 = vperm.xlu0 %507, %v502
        %v509 = vpop.permute.xlu0 %508
        %512 = vset.pattern.permute.xlu0 0
        %513 = vperm.xlu0 %512, %v503
        %v514 = vpop.permute.xlu0 %513
        %517 = vset.pattern.permute.xlu0 0
        %518 = vperm.xlu0 %517, %v504
        %v519 = vpop.permute.xlu0 %518
        %522 = vset.pattern.permute.xlu0 0
        %523 = vperm.xlu0 %522, %v505
        %v524 = vpop.permute.xlu0 %523
        %v530 = vunpack.c.l.b16 %v494
        %v531 = vunpack.c.l.b16 %v495
        %v532 = vunpack.c.l.b16 %v496
        %v533 = vunpack.c.l.b16 %v497
        %v534 = vpack.c.b16 %v531, %v530
        %v535 = vpack.c.b16 %v533, %v532
        %vm536 = vcmask 523264
        %v538 = vsel %vm536, %v534, 0
        %v541 = vsel %vm536, %v535, 0
        %543 = vmatprep.subr.bf16.mxu0 0
        %544 = vmatpush1.bf16.msra.mxu0 %v498
        %545 = vmatprep.subr.bf16.mxu0 0
        %546 = vmatpush1.bf16.msra.mxu0 %v499
        %547 = vmatprep.subr.bf16.mxu0 0
        %548 = vmatpush1.bf16.msra.mxu0 %v500
        %549 = vmatprep.subr.bf16.mxu0 0
        %550 = vmatpush1.bf16.msra.mxu0 %v501
        %551 = vmatprep.subr.bf16.mxu0 0
        %552 = vmatpush1.bf16.msra.mxu0 0
        %553 = vmatprep.subr.bf16.mxu0 0
        %554 = vmatpush1.bf16.msra.mxu0 0
        %555 = vmatprep.subr.bf16.mxu0 0
        %556 = vmatpush1.bf16.msra.mxu0 0
        %557 = vmatprep.subr.bf16.mxu0 0
        %558 = vmatpush1.bf16.msra.mxu0 0
        %559 = vmatprep.subr.bf16.mxu0 0
        %560 = vmatpush1.bf16.msra.mxu0 0
        %561 = vmatprep.subr.bf16.mxu0 0
        %562 = vmatpush1.bf16.msra.mxu0 0
        %563 = vmatprep.subr.bf16.mxu0 0
        %564 = vmatpush1.bf16.msra.mxu0 0
        %565 = vmatprep.subr.bf16.mxu0 0
        %566 = vmatpush1.bf16.msra.mxu0 0
        %567 = vmatprep.subr.bf16.mxu0 0
        %568 = vmatpush1.bf16.msra.mxu0 0
        %569 = vmatprep.subr.bf16.mxu0 0
        %570 = vmatpush1.bf16.msra.mxu0 0
        %571 = vmatprep.subr.bf16.mxu0 0
        %572 = vmatpush1.bf16.msra.mxu0 0
        %573 = vmatprep.subr.bf16.mxu0 0
        %574 = vmatpush1.bf16.msra.mxu0 0
        %575 = vmatprep.mubr.bf16.mxu0 0
        %576 = vmatmul.mubr.bf16.gmra.mrb[0].mxu0 %v538
        %v577 = vpop.f32.mrb[0].mxu0
        %v578 = vadd.f32 %v509, %v577
        %v579 = vpop.f32.mrb[0].mxu0
        %v580 = vpop.f32.mrb[0].mxu0
        %v581 = vadd.f32 %v514, %v580
        %v582 = vpop.f32.mrb[0].mxu0
        %583 = vmatprep.mubr.bf16.mxu0 0
        %584 = vmatmul.mubr.bf16.gmra.mrb[0].mxu0 %v541
        %v585 = vpop.f32.mrb[0].mxu0
        %v586 = vadd.f32 %v519, %v585
        %v587 = vpop.f32.mrb[0].mxu0
        %v588 = vpop.f32.mrb[0].mxu0
        %v589 = vadd.f32 %v524, %v588
        %v590 = vpop.f32.mrb[0].mxu0
        %591 = vdwg.mxu0
        %v592 = vmax.f32 %v578, 0.0
        %v593 = vmax.f32 %v581, 0.0
        %v594 = vmax.f32 %v586, 0.0
        %v595 = vmax.f32 %v589, 0.0
        %v596 = vld [vmem:[%s5] sm:$0x1]
        %v597 = vpack.c.bf16 %v593, %v592
        %v598 = vpack.c.bf16 %v595, %v594
        %v599 = vld [vmem:[#allocation2] sm:$0x1]
        %601 = vset.pattern.permute.xlu0 0
        %602 = vperm.xlu0 %601, %v599
        %v603 = vpop.permute.xlu0 %602
        %v605 = vlaneseq
        %v606 = vshrl.u32 %v605, 7
        %v607 = vsub.s32 0, %v606
        %v608 = vrot.slane %v603, %v607
        %vm609 = vcmask 261120
        %v611 = vsel %vm609, %v596, 0
        %613 = vmatprep.subr.bf16.mxu0 0
        %614 = vmatpush1.bf16.msra.mxu0 %v597
        %615 = vmatprep.subr.bf16.mxu0 0
        %616 = vmatpush1.bf16.msra.mxu0 %v598
        %617 = vmatprep.subr.bf16.mxu0 0
        %618 = vmatpush1.bf16.msra.mxu0 0
        %619 = vmatprep.subr.bf16.mxu0 0
        %620 = vmatpush1.bf16.msra.mxu0 0
        %621 = vmatprep.subr.bf16.mxu0 0
        %622 = vmatpush1.bf16.msra.mxu0 0
        %623 = vmatprep.subr.bf16.mxu0 0
        %624 = vmatpush1.bf16.msra.mxu0 0
        %625 = vmatprep.subr.bf16.mxu0 0
        %626 = vmatpush1.bf16.msra.mxu0 0
        %627 = vmatprep.subr.bf16.mxu0 0
        %628 = vmatpush1.bf16.msra.mxu0 0
        %629 = vmatprep.subr.bf16.mxu0 0
        %630 = vmatpush1.bf16.msra.mxu0 0
        %631 = vmatprep.subr.bf16.mxu0 0
        %632 = vmatpush1.bf16.msra.mxu0 0
        %633 = vmatprep.subr.bf16.mxu0 0
        %634 = vmatpush1.bf16.msra.mxu0 0
        %635 = vmatprep.subr.bf16.mxu0 0
        %636 = vmatpush1.bf16.msra.mxu0 0
        %637 = vmatprep.subr.bf16.mxu0 0
        %638 = vmatpush1.bf16.msra.mxu0 0
        %639 = vmatprep.subr.bf16.mxu0 0
        %640 = vmatpush1.bf16.msra.mxu0 0
        %641 = vmatprep.subr.bf16.mxu0 0
        %642 = vmatpush1.bf16.msra.mxu0 0
        %643 = vmatprep.subr.bf16.mxu0 0
        %644 = vmatpush1.bf16.msra.mxu0 0
        %645 = vmatprep.mubr.bf16.mxu0 0
        %646 = vmatmul.mubr.bf16.gmra.mrb[0].mxu0 %v611
        %v647 = vpop.f32.mrb[0].mxu0
        %v648 = vadd.f32 %v608, %v647
        %v649 = vpop.f32.mrb[0].mxu0
        %v650 = vpop.f32.mrb[0].mxu0
        %v651 = vpop.f32.mrb[0].mxu0
        %652 = vdwg.mxu0
        %v653 = vxor.u32 %v648, 2147483648
        %v654 = vmul.f32 %v653, 1.442695
        %v655 = vpow.pop %v654
        %v656 = vadd.f32 %v655, 1.0
        %v657 = vrcp.pop %v656
        %v658 = vmul.f32 1.0, %v657
        %659 = vst [vmem:[%s322] sm:$0x1] %v658
        %s660 = sand.u32 %s183, 1
        %s661 = scalar_lea.sflag [#allocation5], %s660
        %s662 = sand.u32 %s183, 1
        %s663 = scalar_lea.vmem [#allocation4], %s662
        // Predicated region
        $region90: #{simple_nn_forward.1} parent=84 // pred_check
          %p664 = pneg %p193
        $region91: #{simple_nn_forward.1} parent=84 // pred_check_branch
          %666 = sbr.rel (%p664) target = $region93
        $region92: #{simple_nn_forward.1} parent=84 // pred_region
          %s668 = ssub.s32 16, 16
          %669 = vsyncadd %s661, %s668
          %s670 = smul.addr %s23, 16
          %s671 = scalar_lea.hbm %s7, %s670
          %s673 = sshll.u32 %s663, 4
          %s674 = int_to_ptr.vmem [resolvable:$true] %s673
          %676 = dma.vmem_to_hbm [thread:$0]  %s674, 16, %s671, %s661
        $region93: #{simple_nn_forward.1} parent=84 // pred_fallthru
          _
      $region85: #{simple_nn_forward.1} parent=5 // pred_fallthru
        _
      %p677 = scmp.le.s32.totalorder 2, %s18
      // Predicated region
      $region94: #{simple_nn_forward.1} parent=5 // pred_check
        %p678 = pneg %p677
      $region95: #{simple_nn_forward.1} parent=5 // pred_check_branch
        %680 = sbr.rel (%p678) target = $region97
      $region96: #{simple_nn_forward.1} parent=5 // pred_region
        %s681 = ssub.s32 %s18, 2
        // Predicated region
        $region98: #{simple_nn_forward.1} parent=96 // pred_check
          %p682 = pneg %p199
        $region99: #{simple_nn_forward.1} parent=96 // pred_check_branch
          %684 = sbr.rel (%p682) target = $region101
        $region100: #{simple_nn_forward.1} parent=96 // pred_region
          %s685 = sand.u32 %s184, 1
          %s686 = scalar_lea.sflag [#allocation5], %s685
          %s687 = sand.u32 %s184, 1
          %s688 = scalar_lea.vmem [#allocation4], %s687
          %689 = dma.done %s686, 16
        $region101: #{simple_nn_forward.1} parent=96 // pred_fallthru
          _
      $region97: #{simple_nn_forward.1} parent=5 // pred_fallthru
        _
    $region6: #{simple_nn_forward.1} parent=1 // loop_footer
      %s22 = sadd.s32 1, %s18
    $region7: #{simple_nn_forward.1} parent=1 // loop_footer_branch
      %17 = sbr.rel target = $region3
    $region8: #{simple_nn_forward.1} parent=1 // loop_exit
      _
    %690 = vsyncpa [#allocation5], 1
    %s691 = scalar_lea.sflag [#allocation5], 1
    %692 = vsyncpa %s691, 1

</llo_original>
